<compile_context>
chip_gen: v7x
topology: tpu7x:2x2x1
jax: 0.10.0
libtpu: 0.0.40
codegen_flags: <defaults>
</compile_context>

<pallas_src>
import jax
import jax.numpy as jnp
from jax.experimental import pallas as pl
from jax.experimental.pallas import tpu as pltpu


def linear_clamp_kernel(x_ref, wb_ref, o_ref):
    # x_ref:  (M, K)     activations
    # wb_ref: (K+1, N)   rows 0..K-1 = W, row K = bias
    # o_ref:  (M, N)     output block (exact module output shape)
    K = x_ref.shape[1]
    w = wb_ref[:K, :]                 # (K, N) sublane-aligned static slice load
    b = wb_ref[K:K + 1, :]            # (1, N)
    acc = jnp.dot(x_ref[...], w, preferred_element_type=jnp.float32)
    acc = acc + b                     # bias broadcast over rows
    acc = jnp.maximum(acc, 0.1)       # clamp_min
    acc = jnp.minimum(acc, 0.3)       # clamp_max
    o_ref[...] = acc.astype(o_ref.dtype)


def pack_linear_params(w, b):
    """w: (K, N), b: (N,) -> (K+1, N) slab with bias as the last row.

    Done once per model (weights are static), so it stays off the per-call path
    and the kernel sees a single parameter DMA stream.
    """
    K, N = w.shape
    wb = jnp.zeros((K + 1, N), dtype=w.dtype)
    wb = wb.at[:K, :].set(w)
    wb = wb.at[K, :].set(b)
    return wb


def linear_clamp(x, wb):
    """x: (M, K), wb: (K+1, N) packed params -> clamp(x @ W + b, 0.1, 0.3): (M, N)."""
    M, K = x.shape
    k_plus_1, N = wb.shape
    assert k_plus_1 == K + 1

    itemsize = jnp.dtype(x.dtype).itemsize
    cost = pl.CostEstimate(
        flops=2 * M * K * N + 3 * M * N,          # matmul + bias + two clamps
        transcendentals=0,
        bytes_accessed=(x.size + wb.size + M * N) * itemsize,
    )

    # Gridless single-block call: whole arrays resident in VMEM, no pipelining
    # scaffolding.  (For large M, switch to a grid over M with "parallel"
    # dimension_semantics to shard across TensorCores on v7x.)
    return pl.pallas_call(
        linear_clamp_kernel,
        out_shape=jax.ShapeDtypeStruct((M, N), x.dtype),
        in_specs=[
            pl.BlockSpec(memory_space=pltpu.MemorySpace.VMEM),
            pl.BlockSpec(memory_space=pltpu.MemorySpace.VMEM),
        ],
        out_specs=pl.BlockSpec(memory_space=pltpu.MemorySpace.VMEM),
        cost_estimate=cost,
    )(x, wb)


if __name__ == "__main__":
    key = jax.random.PRNGKey(0)
    kx, kw, kb = jax.random.split(key, 3)

    # Matches torch.empty(32, 16) input and nn.Linear(16, 16) parameters.
    M, K, N = 32, 16, 16
    x = jax.random.normal(kx, (M, K), dtype=jnp.float32)

    # Deterministic init mimicking nn.Linear's uniform(-1/sqrt(K), 1/sqrt(K)).
    bound = 1.0 / jnp.sqrt(jnp.float32(K))
    w_t = jax.random.uniform(kw, (N, K), dtype=jnp.float32, minval=-bound, maxval=bound)
    b = jax.random.uniform(kb, (N,), dtype=jnp.float32, minval=-bound, maxval=bound)
    w = w_t.T  # kernel layout: (in_features, out_features)

    wb = pack_linear_params(w, b)       # hoisted, once-per-model prep
    out = linear_clamp(x, wb)
    jax.block_until_ready(out)

    # Reference check in plain JAX.
    ref = jnp.minimum(jnp.maximum(x @ w + b, 0.1), 0.3)
    assert out.shape == (M, N)
    assert jnp.allclose(out, ref, atol=1e-5, rtol=1e-5)

    print("KERNEL_OK")
</pallas_src>

<mosaic_0001>
module attributes {stable_mosaic.version = 11 : i64} {
  func.func @linear_clamp_kernel(%arg0: memref<32x16xf32, #tpu.memory_space<vmem>>, %arg1: memref<17x16xf32, #tpu.memory_space<vmem>>, %arg2: memref<32x16xf32, #tpu.memory_space<vmem>>) attributes {dimension_semantics = [], scalar_prefetch = 0 : i64, scratch_operands = 0 : i64, tpu.core_type = #tpu.core_type<tc>} {
    %c0 = arith.constant 0 : index
    %c0_0 = arith.constant 0 : index
    %0 = vector.load %arg1[%c0, %c0_0] : memref<17x16xf32, #tpu.memory_space<vmem>>, vector<16x16xf32>
    %c16 = arith.constant 16 : index
    %c0_1 = arith.constant 0 : index
    %1 = vector.load %arg1[%c16, %c0_1] : memref<17x16xf32, #tpu.memory_space<vmem>>, vector<1x16xf32>
    %c0_2 = arith.constant 0 : index
    %c0_3 = arith.constant 0 : index
    %2 = vector.load %arg0[%c0_2, %c0_3] : memref<32x16xf32, #tpu.memory_space<vmem>>, vector<32x16xf32>
    %cst = arith.constant dense<0.000000e+00> : vector<32x16xf32>
    %3 = tpu.matmul %2, %0, %cst {dimension_numbers = #tpu.dot_dimension_numbers<[1], [0], [0], [1], [0, 0, 1, 1], [], []>} : vector<32x16xf32>, vector<16x16xf32>, vector<32x16xf32> -> vector<32x16xf32>
    %4 = vector.broadcast %1 : vector<1x16xf32> to vector<32x16xf32>
    %5 = arith.addf %3, %4 : vector<32x16xf32>
    %cst_4 = arith.constant 1.000000e-01 : f32
    %6 = vector.broadcast %cst_4 : f32 to vector<32x16xf32>
    %7 = arith.maximumf %5, %6 : vector<32x16xf32>
    %cst_5 = arith.constant 3.000000e-01 : f32
    %8 = vector.broadcast %cst_5 : f32 to vector<32x16xf32>
    %9 = arith.minimumf %7, %8 : vector<32x16xf32>
    %c0_6 = arith.constant 0 : index
    %c0_7 = arith.constant 0 : index
    %10 = vector.load %arg2[%c0_6, %c0_7] : memref<32x16xf32, #tpu.memory_space<vmem>>, vector<32x16xf32>
    tpu.vector_store %arg2[%c0_6, %c0_7], %9 {strides = array<i32>} : memref<32x16xf32, #tpu.memory_space<vmem>>, vector<32x16xf32>,
    return
  }
}

</mosaic_0001>

<llo_original>
// kernel: tpu_custom_call.1
$region0: #{tpu_custom_call.1}
  #allocation0 [shape = 'u32[]', space=smem, size = 0x4, offset = 0x4, fixed_abs, tag = 'smem constant byte address 0x4 - core index']
  #allocation1 [shape = 'u32[144,128]{1,0:T(1,128)}', space=vmem, size = 0x12000, scoped, tag = 'internal scratch']
  %s0 = inlined_call_operand.vmem [shape: f32[32,16], index: 0, kind: input, shape index: {}]
  %s1 = inlined_call_operand.vmem [shape: f32[17,16], index: 1, kind: input, shape index: {}]
  %s2 = inlined_call_operand.vmem [shape: f32[32,16], index: 2, kind: output, shape index: {}]
  %s3 = sld [smem:[#allocation0]]
  $region18: #{tpu_custom_call.1} parent=0
    _
  %s5 = ssub.s32 1, %s3
  %s6 = scalar_select 0, %s5, %s3
  // Predicated region
  $region2: #{tpu_custom_call.1} parent=0 // pred_check
    _
  $region3: #{tpu_custom_call.1} parent=0 // pred_check_branch
    %8 = sbr.rel (0) target = $region5
  $region4: #{tpu_custom_call.1} parent=0 // pred_region
    _
  $region5: #{tpu_custom_call.1} parent=0 // pred_fallthru
    _
  // Predicated region
  $region6: #{tpu_custom_call.1} parent=0 // pred_check
    _
  $region7: #{tpu_custom_call.1} parent=0 // pred_check_branch
    %10 = sbr.rel (0) target = $region9
  $region8: #{tpu_custom_call.1} parent=0 // pred_region
    _
  $region9: #{tpu_custom_call.1} parent=0 // pred_fallthru
    _
  %v11 = vld [vmem:[%s1] sm:$0xff]
  %v12 = vld [vmem:[%s1 + $0x8] sm:$0xff]
  %v13 = vld [vmem:[%s1 + $0x10] sm:$0x1]
  %v14 = vld [vmem:[%s0] sm:$0xff]
  %v15 = vld [vmem:[%s0 + $0x8] sm:$0xff]
  %v16 = vld [vmem:[%s0 + $0x10] sm:$0xff]
  %v17 = vld [vmem:[%s0 + $0x18] sm:$0xff]
  %v18 = vlaneseq
  %v19 = vshrl.u32 %v18, 7
  %v20 = vsub.s32 0, %v19
  %v21 = vrot.slane %v13, %v20
  %vm22 = vcmask 130048
  %v24 = vsel %vm22, %v14, 0
  %v27 = vsel %vm22, %v15, 0
  %v30 = vsel %vm22, %v16, 0
  %v33 = vsel %vm22, %v17, 0
  %35 = vmatprep.subr.mxu0 0.0
  %36 = vmatpush1.msra.mxu0 %v11
  %37 = vmatprep.subr.mxu0 0.0
  %38 = vmatpush1.msra.mxu0 %v12
  %39 = vmatprep.subr.mxu0 0.0
  %40 = vmatpush1.msra.mxu0 0.0
  %41 = vmatprep.subr.mxu0 0.0
  %42 = vmatpush1.msra.mxu0 0.0
  %43 = vmatprep.subr.mxu0 0.0
  %44 = vmatpush1.msra.mxu0 0.0
  %45 = vmatprep.subr.mxu0 0.0
  %46 = vmatpush1.msra.mxu0 0.0
  %47 = vmatprep.subr.mxu0 0.0
  %48 = vmatpush1.msra.mxu0 0.0
  %49 = vmatprep.subr.mxu0 0.0
  %50 = vmatpush1.msra.mxu0 0.0
  %51 = vmatprep.subr.mxu0 0.0
  %52 = vmatpush1.msra.mxu0 0.0
  %53 = vmatprep.subr.mxu0 0.0
  %54 = vmatpush1.msra.mxu0 0.0
  %55 = vmatprep.subr.mxu0 0.0
  %56 = vmatpush1.msra.mxu0 0.0
  %57 = vmatprep.subr.mxu0 0.0
  %58 = vmatpush1.msra.mxu0 0.0
  %59 = vmatprep.subr.mxu0 0.0
  %60 = vmatpush1.msra.mxu0 0.0
  %61 = vmatprep.subr.mxu0 0.0
  %62 = vmatpush1.msra.mxu0 0.0
  %63 = vmatprep.subr.mxu0 0.0
  %64 = vmatpush1.msra.mxu0 0.0
  %65 = vmatprep.subr.mxu0 0.0
  %66 = vmatpush1.msra.mxu0 0.0
  %67 = vmatprep.subr.mxu0 0.0
  %68 = vmatpush1.msra.mxu0 0.0
  %69 = vmatprep.subr.mxu0 0.0
  %70 = vmatpush1.msra.mxu0 0.0
  %71 = vmatprep.subr.mxu0 0.0
  %72 = vmatpush1.msra.mxu0 0.0
  %73 = vmatprep.subr.mxu0 0.0
  %74 = vmatpush1.msra.mxu0 0.0
  %75 = vmatprep.subr.mxu0 0.0
  %76 = vmatpush1.msra.mxu0 0.0
  %77 = vmatprep.subr.mxu0 0.0
  %78 = vmatpush1.msra.mxu0 0.0
  %79 = vmatprep.subr.mxu0 0.0
  %80 = vmatpush1.msra.mxu0 0.0
  %81 = vmatprep.subr.mxu0 0.0
  %82 = vmatpush1.msra.mxu0 0.0
  %83 = vmatprep.subr.mxu0 0.0
  %84 = vmatpush1.msra.mxu0 0.0
  %85 = vmatprep.subr.mxu0 0.0
  %86 = vmatpush1.msra.mxu0 0.0
  %87 = vmatprep.subr.mxu0 0.0
  %88 = vmatpush1.msra.mxu0 0.0
  %89 = vmatprep.subr.mxu0 0.0
  %90 = vmatpush1.msra.mxu0 0.0
  %91 = vmatprep.subr.mxu0 0.0
  %92 = vmatpush1.msra.mxu0 0.0
  %93 = vmatprep.subr.mxu0 0.0
  %94 = vmatpush1.msra.mxu0 0.0
  %95 = vmatprep.subr.mxu0 0.0
  %96 = vmatpush1.msra.mxu0 0.0
  %97 = vmatprep.subr.mxu0 0.0
  %98 = vmatpush1.msra.mxu0 0.0
  %99 = vmatprep.mubr.f32.mxu0 0.0
  %100 = vmatmul.mubr.f32.gmra.mrb[0].mxu0 %v24
  %v101 = vpop.f32.mrb[0].mxu0
  %v102 = vadd.f32 %v21, %v101
  %v103 = vpop.f32.mrb[0].mxu0
  %104 = vmatprep.mubr.f32.mxu0 0.0
  %105 = vmatmul.mubr.f32.gmra.mrb[0].mxu0 %v27
  %v106 = vpop.f32.mrb[0].mxu0
  %v107 = vadd.f32 %v21, %v106
  %v108 = vpop.f32.mrb[0].mxu0
  %109 = vmatprep.mubr.f32.mxu0 0.0
  %110 = vmatmul.mubr.f32.gmra.mrb[0].mxu0 %v30
  %v111 = vpop.f32.mrb[0].mxu0
  %v112 = vadd.f32 %v21, %v111
  %v113 = vpop.f32.mrb[0].mxu0
  %114 = vmatprep.mubr.f32.mxu0 0.0
  %115 = vmatmul.mubr.f32.gmra.mrb[0].mxu0 %v33
  %v116 = vpop.f32.mrb[0].mxu0
  %v117 = vadd.f32 %v21, %v116
  %v118 = vpop.f32.mrb[0].mxu0
  %119 = vdwg.mxu0
  %v120 = vmax.f32 %v102, 0.1
  %v121 = vmax.f32 %v107, 0.1
  %v122 = vmax.f32 %v112, 0.1
  %v123 = vmax.f32 %v117, 0.1
  %v124 = vmin.f32 %v120, 0.3
  %v125 = vmin.f32 %v121, 0.3
  %v126 = vmin.f32 %v122, 0.3
  %v127 = vmin.f32 %v123, 0.3
  %128 = vst.msk [vmem:[%s2] sm:$0xff] %vm22, %v124
  %129 = vst.msk [vmem:[%s2 + $0x8] sm:$0xff] %vm22, %v125
  %130 = vst.msk [vmem:[%s2 + $0x10] sm:$0xff] %vm22, %v126
  %131 = vst.msk [vmem:[%s2 + $0x18] sm:$0xff] %vm22, %v127
  // Predicated region
  $region10: #{tpu_custom_call.1} parent=0 // pred_check
    _
  $region11: #{tpu_custom_call.1} parent=0 // pred_check_branch
    %133 = sbr.rel (0) target = $region13
  $region12: #{tpu_custom_call.1} parent=0 // pred_region
    _
  $region13: #{tpu_custom_call.1} parent=0 // pred_fallthru
    _
  // Predicated region
  $region14: #{tpu_custom_call.1} parent=0 // pred_check
    _
  $region15: #{tpu_custom_call.1} parent=0 // pred_check_branch
    %135 = sbr.rel (0) target = $region17
  $region16: #{tpu_custom_call.1} parent=0 // pred_region
    _
  $region17: #{tpu_custom_call.1} parent=0 // pred_fallthru
    _

</llo_original>
